<compile_context>
chip_gen: v7x
topology: tpu7x:2x2x1
jax: 0.10.0
libtpu: 0.0.40
codegen_flags: <defaults>
</compile_context>

<pallas_src>
import math
import jax
import jax.numpy as jnp
from jax.experimental import pallas as pl

# --- small BERT-like config ---
BATCH = 2
SEQ = 8
HIDDEN = 32
NUM_HEADS = 4
HEAD_DIM = HIDDEN // NUM_HEADS
INTERMEDIATE = 128
LN_EPS = 1e-12


def _layernorm(x, gamma, beta, eps):
    mean = jnp.mean(x, axis=-1, keepdims=True)
    var = jnp.mean((x - mean) ** 2, axis=-1, keepdims=True)
    return (x - mean) * jax.lax.rsqrt(var + eps) * gamma + beta


def _gelu_erf(x):
    # exact erf-based gelu (transformers ACT2FN["gelu"]) -- used by the reference
    return 0.5 * x * (1.0 + jax.lax.erf(x * (1.0 / math.sqrt(2.0))))


def _gelu_tanh(x):
    # tanh-approximate GELU (routes to EUP tanh; deviation from erf-GELU ~1e-3)
    c = math.sqrt(2.0 / math.pi)
    return 0.5 * x * (1.0 + jnp.tanh(c * (x + 0.044715 * x * x * x)))


def bert_layer(hidden_states, attention_mask, params):
    B, S, H = hidden_states.shape
    NH = NUM_HEADS
    HD = H // NH
    T = B * S
    I = params["wi"].shape[1]
    scale = 1.0 / math.sqrt(HD)

    # ---------- wrapper-side (free XLA) re-layouts ----------
    # Fused QKV weight/bias, 1/sqrt(HD) folded into the Q part. bf16 weights
    # (in production these bf16 copies would be materialized once at param
    # init, not per call).
    wqkv = jnp.concatenate(
        [params["wq"] * scale, params["wk"], params["wv"]], axis=1
    ).astype(jnp.bfloat16)                                        # (H, 3H)
    bqkv = jnp.concatenate(
        [params["bq"] * scale, params["bk"], params["bv"]], axis=1)  # (1, 3H) f32

    wo = params["wo"].astype(jnp.bfloat16)                        # (H, H)
    wi = params["wi"].astype(jnp.bfloat16)                        # (H, I)
    wo2 = params["wo2"].astype(jnp.bfloat16)                      # (I, H)

    # Pack all 1-row f32 vectors into one (8, PAD) slab = a single VMEM tile /
    # single DMA (rows: bqkv, bi, bo, ln1_g, ln1_b, bo2, ln2_g, ln2_b).
    PAD = max(3 * H, I)

    def _row(v):
        v = v.reshape(1, -1)
        return jnp.pad(v, ((0, 0), (0, PAD - v.shape[1])))

    vec_slab = jnp.concatenate(
        [_row(bqkv), _row(params["bi"]), _row(params["bo"]),
         _row(params["ln1_g"]), _row(params["ln1_b"]),
         _row(params["bo2"]), _row(params["ln2_g"]), _row(params["ln2_b"])],
        axis=0)                                                   # (8, PAD) f32

    # (T, T) additive mask = attention_mask per key position + block-diagonal
    # batch isolation (cross-batch entries -1e9 -> exp underflows to exactly 0),
    # so a single softmax pass over all (B, NH) rows is identical to the
    # per-batch softmax of the reference.
    km = attention_mask.reshape(T)                                # mask[b,0,k] per key token
    batch_ids = jnp.repeat(jnp.arange(B), S)
    same = batch_ids[:, None] == batch_ids[None, :]
    mask_full = jnp.where(same, km[None, :], jnp.float32(-1e9))   # (T, T)

    x2d = hidden_states.reshape(T, H)                             # free reshape

    # ---------- the kernel ----------
    def kernel(x_ref, mask_ref, wqkv_ref, wo_ref, wi_ref, wo2_ref, vec_ref,
               out_ref):
        x = x_ref[...]                                   # (T, H) f32
        xb = x.astype(jnp.bfloat16)

        vec = vec_ref[...]                               # (8, PAD) f32
        bqkv_v = vec[0:1, :3 * H]
        bi_v = vec[1:2, :I]
        bo_v = vec[2:3, :H]
        ln1_g = vec[3:4, :H]
        ln1_b = vec[4:5, :H]
        bo2_v = vec[5:6, :H]
        ln2_g = vec[6:7, :H]
        ln2_b = vec[7:8, :H]

        # Fused QKV projection: one (T,H)@(H,3H) MXU matmul, f32 accumulation.
        qkv = jnp.dot(xb, wqkv_ref[...],
                      preferred_element_type=jnp.float32) + bqkv_v   # (T, 3H)
        qkv_b = qkv.astype(jnp.bfloat16)

        # Heads -> batch dim of a 3-D einsum (static lane slices, stack on the
        # leading dim; no minor-dim reshapes).  Q already carries 1/sqrt(HD).
        qH = jnp.stack([qkv_b[:, h * HD:(h + 1) * HD] for h in range(NH)], axis=0)
        kH = jnp.stack([qkv_b[:, H + h * HD:H + (h + 1) * HD] for h in range(NH)], axis=0)
        vH = jnp.stack([qkv_b[:, 2 * H + h * HD:2 * H + (h + 1) * HD] for h in range(NH)], axis=0)
        # each: (NH, T, HD) bf16

        # Single batched attention over all heads / batch rows (mask enforces
        # batch isolation), one softmax pass.
        scores = jnp.einsum("htd,hkd->htk", qH, kH,
                            preferred_element_type=jnp.float32)     # (NH, T, T)
        scores = scores + mask_ref[...]
        scores = scores - jnp.max(scores, axis=-1, keepdims=True)
        e = jnp.exp(scores)
        probs = e * pl.reciprocal(jnp.sum(e, axis=-1, keepdims=True), approx=True)
        # TODO(synk): attention_probs dropout omitted (eval-mode identity).
        ctxH = jnp.einsum("htk,hkd->htd", probs.astype(jnp.bfloat16), vH,
                          preferred_element_type=jnp.float32)        # (NH, T, HD)

        # Lane-concatenate heads back into a (T, H) slab, then ONE output
        # projection matmul (== concat-over-heads @ Wo).
        ctx = jnp.concatenate([ctxH[h] for h in range(NH)], axis=-1)  # (T, H) f32

        attn = jnp.dot(ctx.astype(jnp.bfloat16), wo_ref[...],
                       preferred_element_type=jnp.float32) + bo_v
        attn = _layernorm(attn + x, ln1_g, ln1_b, LN_EPS)

        # BertIntermediate: dense + gelu (tanh approx).
        inter = jnp.dot(attn.astype(jnp.bfloat16), wi_ref[...],
                        preferred_element_type=jnp.float32) + bi_v
        inter = _gelu_tanh(inter)

        # BertOutput: dense + residual + LayerNorm.
        out = jnp.dot(inter.astype(jnp.bfloat16), wo2_ref[...],
                      preferred_element_type=jnp.float32) + bo2_v
        out = _layernorm(out + attn, ln2_g, ln2_b, LN_EPS)

        out_ref[...] = out

    out2d = pl.pallas_call(
        kernel,
        out_shape=jax.ShapeDtypeStruct((T, H), jnp.float32),
    )(x2d, mask_full, wqkv, wo, wi, wo2, vec_slab)

    return out2d.reshape(B, S, H)


def init_params(key):
    ks = jax.random.split(key, 8)
    std = 0.02
    return {
        # linear weights stored as [in, out] (i.e. torch weight.T)
        "wq": jax.random.normal(ks[0], (HIDDEN, HIDDEN), jnp.float32) * std,
        "bq": jax.random.normal(ks[1], (1, HIDDEN), jnp.float32) * std,
        "wk": jax.random.normal(ks[2], (HIDDEN, HIDDEN), jnp.float32) * std,
        "bk": jax.random.normal(ks[3], (1, HIDDEN), jnp.float32) * std,
        "wv": jax.random.normal(ks[4], (HIDDEN, HIDDEN), jnp.float32) * std,
        "bv": jax.random.normal(ks[5], (1, HIDDEN), jnp.float32) * std,
        "wo": jax.random.normal(ks[6], (HIDDEN, HIDDEN), jnp.float32) * std,
        "bo": jnp.zeros((1, HIDDEN), jnp.float32),
        "ln1_g": jnp.ones((1, HIDDEN), jnp.float32),
        "ln1_b": jnp.zeros((1, HIDDEN), jnp.float32),
        "wi": jax.random.normal(ks[7], (HIDDEN, INTERMEDIATE), jnp.float32) * std,
        "bi": jnp.zeros((1, INTERMEDIATE), jnp.float32),
        "wo2": jax.random.normal(jax.random.fold_in(key, 99),
                                 (INTERMEDIATE, HIDDEN), jnp.float32) * std,
        "bo2": jnp.zeros((1, HIDDEN), jnp.float32),
        "ln2_g": jnp.ones((1, HIDDEN), jnp.float32),
        "ln2_b": jnp.zeros((1, HIDDEN), jnp.float32),
    }


def bert_layer_ref(x, mask, p):
    """Pure-JAX reference matching the torch module (dropout = identity)."""
    B, S, H = x.shape
    q = x @ p["wq"] + p["bq"]
    k = x @ p["wk"] + p["bk"]
    v = x @ p["wv"] + p["bv"]

    def split(t):  # (B,S,H) -> (B,nh,S,hd)
        return t.reshape(B, S, NUM_HEADS, HEAD_DIM).transpose(0, 2, 1, 3)

    qh, kh, vh = split(q), split(k), split(v)
    scores = jnp.einsum("bnqd,bnkd->bnqk", qh, kh) / math.sqrt(HEAD_DIM)
    scores = scores + mask[:, None, :, :]          # (B,1,1,S) broadcast
    probs = jax.nn.softmax(scores, axis=-1)
    ctx = jnp.einsum("bnqk,bnkd->bnqd", probs, vh)
    ctx = ctx.transpose(0, 2, 1, 3).reshape(B, S, H)
    attn = ctx @ p["wo"] + p["bo"]
    attn = _layernorm(attn + x, p["ln1_g"], p["ln1_b"], LN_EPS)
    inter = _gelu_erf(attn @ p["wi"] + p["bi"])
    out = inter @ p["wo2"] + p["bo2"]
    out = _layernorm(out + attn, p["ln2_g"], p["ln2_b"], LN_EPS)
    return out


if __name__ == "__main__":
    key = jax.random.PRNGKey(0)
    k_x, k_m, k_p = jax.random.split(key, 3)

    hidden_states = jax.random.normal(k_x, (BATCH, SEQ, HIDDEN), jnp.float32)
    # additive attention mask: 0 for visible, -10000 for masked (last 2 tokens
    # of batch 1 masked), shape (B, 1, S)
    mask = jnp.zeros((BATCH, 1, SEQ), jnp.float32)
    mask = mask.at[1, 0, -2:].set(-10000.0)

    params = init_params(k_p)

    out = bert_layer(hidden_states, mask, params)
    out = jax.block_until_ready(out)

    ref = jax.block_until_ready(bert_layer_ref(hidden_states, mask, params))
    assert out.shape == (BATCH, SEQ, HIDDEN)
    assert jnp.allclose(out, ref, atol=2e-2, rtol=2e-2), (
        f"max abs diff {jnp.max(jnp.abs(out - ref))}")

    print("KERNEL_OK")
</pallas_src>

<mosaic_0001>
module attributes {stable_mosaic.version = 11 : i64} {
  func.func @kernel(%arg0: memref<16x32xf32, #tpu.memory_space<vmem>>, %arg1: memref<16x16xf32, #tpu.memory_space<vmem>>, %arg2: memref<32x96xbf16, #tpu.memory_space<vmem>>, %arg3: memref<32x32xbf16, #tpu.memory_space<vmem>>, %arg4: memref<32x128xbf16, #tpu.memory_space<vmem>>, %arg5: memref<128x32xbf16, #tpu.memory_space<vmem>>, %arg6: memref<8x128xf32, #tpu.memory_space<vmem>>, %arg7: memref<16x32xf32, #tpu.memory_space<vmem>>) attributes {dimension_semantics = [], scalar_prefetch = 0 : i64, scratch_operands = 0 : i64, tpu.core_type = #tpu.core_type<tc>} {
    %c0 = arith.constant 0 : index
    %c0_0 = arith.constant 0 : index
    %0 = vector.load %arg0[%c0, %c0_0] : memref<16x32xf32, #tpu.memory_space<vmem>>, vector<16x32xf32>
    %1 = arith.truncf %0 : vector<16x32xf32> to vector<16x32xbf16>
    %c0_1 = arith.constant 0 : index
    %c0_2 = arith.constant 0 : index
    %2 = vector.load %arg6[%c0_1, %c0_2] : memref<8x128xf32, #tpu.memory_space<vmem>>, vector<8x128xf32>
    %3 = vector.extract_strided_slice %2 {offsets = [0, 0], sizes = [1, 96], strides = [1, 1]} : vector<8x128xf32> to vector<1x96xf32>
    %4 = vector.extract_strided_slice %2 {offsets = [1, 0], sizes = [1, 128], strides = [1, 1]} : vector<8x128xf32> to vector<1x128xf32>
    %5 = vector.extract_strided_slice %2 {offsets = [2, 0], sizes = [1, 32], strides = [1, 1]} : vector<8x128xf32> to vector<1x32xf32>
    %6 = vector.extract_strided_slice %2 {offsets = [3, 0], sizes = [1, 32], strides = [1, 1]} : vector<8x128xf32> to vector<1x32xf32>
    %7 = vector.extract_strided_slice %2 {offsets = [4, 0], sizes = [1, 32], strides = [1, 1]} : vector<8x128xf32> to vector<1x32xf32>
    %8 = vector.extract_strided_slice %2 {offsets = [5, 0], sizes = [1, 32], strides = [1, 1]} : vector<8x128xf32> to vector<1x32xf32>
    %9 = vector.extract_strided_slice %2 {offsets = [6, 0], sizes = [1, 32], strides = [1, 1]} : vector<8x128xf32> to vector<1x32xf32>
    %10 = vector.extract_strided_slice %2 {offsets = [7, 0], sizes = [1, 32], strides = [1, 1]} : vector<8x128xf32> to vector<1x32xf32>
    %c0_3 = arith.constant 0 : index
    %c0_4 = arith.constant 0 : index
    %11 = vector.load %arg2[%c0_3, %c0_4] : memref<32x96xbf16, #tpu.memory_space<vmem>>, vector<32x96xbf16>
    %cst = arith.constant dense<0.000000e+00> : vector<16x96xf32>
    %12 = tpu.matmul %1, %11, %cst {dimension_numbers = #tpu.dot_dimension_numbers<[1], [0], [0], [1], [0, 0, 1, 1], [], []>} : vector<16x32xbf16>, vector<32x96xbf16>, vector<16x96xf32> -> vector<16x96xf32>
    %13 = vector.broadcast %3 : vector<1x96xf32> to vector<16x96xf32>
    %14 = arith.addf %12, %13 : vector<16x96xf32>
    %15 = arith.truncf %14 : vector<16x96xf32> to vector<16x96xbf16>
    %16 = vector.extract_strided_slice %15 {offsets = [0, 0], sizes = [16, 8], strides = [1, 1]} : vector<16x96xbf16> to vector<16x8xbf16>
    %17 = vector.extract_strided_slice %15 {offsets = [0, 8], sizes = [16, 8], strides = [1, 1]} : vector<16x96xbf16> to vector<16x8xbf16>
    %18 = vector.extract_strided_slice %15 {offsets = [0, 16], sizes = [16, 8], strides = [1, 1]} : vector<16x96xbf16> to vector<16x8xbf16>
    %19 = vector.extract_strided_slice %15 {offsets = [0, 24], sizes = [16, 8], strides = [1, 1]} : vector<16x96xbf16> to vector<16x8xbf16>
    %20 = vector.shape_cast %16 : vector<16x8xbf16> to vector<1x16x8xbf16>
    %21 = vector.shape_cast %17 : vector<16x8xbf16> to vector<1x16x8xbf16>
    %22 = vector.shape_cast %18 : vector<16x8xbf16> to vector<1x16x8xbf16>
    %23 = vector.shape_cast %19 : vector<16x8xbf16> to vector<1x16x8xbf16>
    %24 = tpu.concatenate %20, %21, %22, %23 in 0 : vector<1x16x8xbf16>, vector<1x16x8xbf16>, vector<1x16x8xbf16>, vector<1x16x8xbf16> -> vector<4x16x8xbf16>
    %25 = vector.extract_strided_slice %15 {offsets = [0, 32], sizes = [16, 8], strides = [1, 1]} : vector<16x96xbf16> to vector<16x8xbf16>
    %26 = vector.extract_strided_slice %15 {offsets = [0, 40], sizes = [16, 8], strides = [1, 1]} : vector<16x96xbf16> to vector<16x8xbf16>
    %27 = vector.extract_strided_slice %15 {offsets = [0, 48], sizes = [16, 8], strides = [1, 1]} : vector<16x96xbf16> to vector<16x8xbf16>
    %28 = vector.extract_strided_slice %15 {offsets = [0, 56], sizes = [16, 8], strides = [1, 1]} : vector<16x96xbf16> to vector<16x8xbf16>
    %29 = vector.shape_cast %25 : vector<16x8xbf16> to vector<1x16x8xbf16>
    %30 = vector.shape_cast %26 : vector<16x8xbf16> to vector<1x16x8xbf16>
    %31 = vector.shape_cast %27 : vector<16x8xbf16> to vector<1x16x8xbf16>
    %32 = vector.shape_cast %28 : vector<16x8xbf16> to vector<1x16x8xbf16>
    %33 = tpu.concatenate %29, %30, %31, %32 in 0 : vector<1x16x8xbf16>, vector<1x16x8xbf16>, vector<1x16x8xbf16>, vector<1x16x8xbf16> -> vector<4x16x8xbf16>
    %34 = vector.extract_strided_slice %15 {offsets = [0, 64], sizes = [16, 8], strides = [1, 1]} : vector<16x96xbf16> to vector<16x8xbf16>
    %35 = vector.extract_strided_slice %15 {offsets = [0, 72], sizes = [16, 8], strides = [1, 1]} : vector<16x96xbf16> to vector<16x8xbf16>
    %36 = vector.extract_strided_slice %15 {offsets = [0, 80], sizes = [16, 8], strides = [1, 1]} : vector<16x96xbf16> to vector<16x8xbf16>
    %37 = vector.extract_strided_slice %15 {offsets = [0, 88], sizes = [16, 8], strides = [1, 1]} : vector<16x96xbf16> to vector<16x8xbf16>
    %38 = vector.shape_cast %34 : vector<16x8xbf16> to vector<1x16x8xbf16>
    %39 = vector.shape_cast %35 : vector<16x8xbf16> to vector<1x16x8xbf16>
    %40 = vector.shape_cast %36 : vector<16x8xbf16> to vector<1x16x8xbf16>
    %41 = vector.shape_cast %37 : vector<16x8xbf16> to vector<1x16x8xbf16>
    %42 = tpu.concatenate %38, %39, %40, %41 in 0 : vector<1x16x8xbf16>, vector<1x16x8xbf16>, vector<1x16x8xbf16>, vector<1x16x8xbf16> -> vector<4x16x8xbf16>
    "tpu.trace_start"() <{level = 10 : i32, message = "htd,hkd->htk"}> : () -> ()
    %cst_5 = arith.constant dense<0.000000e+00> : vector<4x16x16xf32>
    %43 = tpu.matmul %24, %33, %cst_5 {dimension_numbers = #tpu.dot_dimension_numbers<[2], [2], [1], [1], [0, 0, 0, 1, 1, 1], [0], [0]>} : vector<4x16x8xbf16>, vector<4x16x8xbf16>, vector<4x16x16xf32> -> vector<4x16x16xf32>
    "tpu.trace_stop"() : () -> ()
    %c0_6 = arith.constant 0 : index
    %c0_7 = arith.constant 0 : index
    %44 = vector.load %arg1[%c0_6, %c0_7] : memref<16x16xf32, #tpu.memory_space<vmem>>, vector<16x16xf32>
    %45 = vector.shape_cast %44 : vector<16x16xf32> to vector<1x16x16xf32>
    %46 = vector.broadcast %45 : vector<1x16x16xf32> to vector<4x16x16xf32>
    %47 = arith.addf %43, %46 : vector<4x16x16xf32>
    %cst_8 = arith.constant dense<0xFF800000> : vector<4x16xf32>
    %48 = vector.multi_reduction <maximumf>, %47, %cst_8 [2] : vector<4x16x16xf32> to vector<4x16xf32>
    %49 = vector.shape_cast %48 : vector<4x16xf32> to vector<4x16x1xf32>
    %50 = vector.broadcast %49 : vector<4x16x1xf32> to vector<4x16x16xf32>
    %51 = arith.subf %47, %50 : vector<4x16x16xf32>
    %52 = math.exp %51 : vector<4x16x16xf32>
    %cst_9 = arith.constant dense<0.000000e+00> : vector<4x16xf32>
    %53 = vector.multi_reduction <add>, %52, %cst_9 [2] : vector<4x16x16xf32> to vector<4x16xf32>
    %54 = vector.shape_cast %53 : vector<4x16xf32> to vector<4x16x1xf32>
    %55 = tpu.reciprocal %54 {approx = true} : vector<4x16x1xf32> -> vector<4x16x1xf32>
    %56 = vector.broadcast %55 : vector<4x16x1xf32> to vector<4x16x16xf32>
    %57 = arith.mulf %52, %56 : vector<4x16x16xf32>
    %58 = arith.truncf %57 : vector<4x16x16xf32> to vector<4x16x16xbf16>
    "tpu.trace_start"() <{level = 10 : i32, message = "htk,hkd->htd"}> : () -> ()
    %cst_10 = arith.constant dense<0.000000e+00> : vector<4x16x8xf32>
    %59 = tpu.matmul %58, %42, %cst_10 {dimension_numbers = #tpu.dot_dimension_numbers<[2], [1], [1], [2], [0, 0, 0, 1, 1, 2], [0], [0]>} : vector<4x16x16xbf16>, vector<4x16x8xbf16>, vector<4x16x8xf32> -> vector<4x16x8xf32>
    "tpu.trace_stop"() : () -> ()
    %60 = vector.extract_strided_slice %59 {offsets = [0, 0, 0], sizes = [1, 16, 8], strides = [1, 1, 1]} : vector<4x16x8xf32> to vector<1x16x8xf32>
    %61 = vector.shape_cast %60 : vector<1x16x8xf32> to vector<16x8xf32>
    %62 = vector.extract_strided_slice %59 {offsets = [1, 0, 0], sizes = [1, 16, 8], strides = [1, 1, 1]} : vector<4x16x8xf32> to vector<1x16x8xf32>
    %63 = vector.shape_cast %62 : vector<1x16x8xf32> to vector<16x8xf32>
    %64 = vector.extract_strided_slice %59 {offsets = [2, 0, 0], sizes = [1, 16, 8], strides = [1, 1, 1]} : vector<4x16x8xf32> to vector<1x16x8xf32>
    %65 = vector.shape_cast %64 : vector<1x16x8xf32> to vector<16x8xf32>
    %66 = vector.extract_strided_slice %59 {offsets = [3, 0, 0], sizes = [1, 16, 8], strides = [1, 1, 1]} : vector<4x16x8xf32> to vector<1x16x8xf32>
    %67 = vector.shape_cast %66 : vector<1x16x8xf32> to vector<16x8xf32>
    %68 = tpu.concatenate %61, %63, %65, %67 in 1 : vector<16x8xf32>, vector<16x8xf32>, vector<16x8xf32>, vector<16x8xf32> -> vector<16x32xf32>
    %69 = arith.truncf %68 : vector<16x32xf32> to vector<16x32xbf16>
    %c0_11 = arith.constant 0 : index
    %c0_12 = arith.constant 0 : index
    %70 = vector.load %arg3[%c0_11, %c0_12] : memref<32x32xbf16, #tpu.memory_space<vmem>>, vector<32x32xbf16>
    %cst_13 = arith.constant dense<0.000000e+00> : vector<16x32xf32>
    %71 = tpu.matmul %69, %70, %cst_13 {dimension_numbers = #tpu.dot_dimension_numbers<[1], [0], [0], [1], [0, 0, 1, 1], [], []>} : vector<16x32xbf16>, vector<32x32xbf16>, vector<16x32xf32> -> vector<16x32xf32>
    %72 = vector.broadcast %5 : vector<1x32xf32> to vector<16x32xf32>
    %73 = arith.addf %71, %72 : vector<16x32xf32>
    %74 = arith.addf %73, %0 : vector<16x32xf32>
    %cst_14 = arith.constant dense<0.000000e+00> : vector<16xf32>
    %75 = vector.multi_reduction <add>, %74, %cst_14 [1] : vector<16x32xf32> to vector<16xf32>
    %76 = vector.shape_cast %75 : vector<16xf32> to vector<16x1xf32>
    %cst_15 = arith.constant 3.200000e+01 : f32
    %77 = vector.broadcast %cst_15 : f32 to vector<16x1xf32>
    %78 = arith.divf %76, %77 : vector<16x1xf32>
    %79 = vector.broadcast %78 : vector<16x1xf32> to vector<16x32xf32>
    %80 = arith.subf %74, %79 : vector<16x32xf32>
    %81 = arith.mulf %80, %80 : vector<16x32xf32>
    %cst_16 = arith.constant dense<0.000000e+00> : vector<16xf32>
    %82 = vector.multi_reduction <add>, %81, %cst_16 [1] : vector<16x32xf32> to vector<16xf32>
    %83 = vector.shape_cast %82 : vector<16xf32> to vector<16x1xf32>
    %cst_17 = arith.constant 3.200000e+01 : f32
    %84 = vector.broadcast %cst_17 : f32 to vector<16x1xf32>
    %85 = arith.divf %83, %84 : vector<16x1xf32>
    %86 = vector.broadcast %78 : vector<16x1xf32> to vector<16x32xf32>
    %87 = arith.subf %74, %86 : vector<16x32xf32>
    %cst_18 = arith.constant 9.99999996E-13 : f32
    %88 = vector.broadcast %cst_18 : f32 to vector<16x1xf32>
    %89 = arith.addf %85, %88 : vector<16x1xf32>
    %90 = math.rsqrt %89 : vector<16x1xf32>
    %91 = vector.broadcast %90 : vector<16x1xf32> to vector<16x32xf32>
    %92 = arith.mulf %87, %91 : vector<16x32xf32>
    %93 = vector.broadcast %6 : vector<1x32xf32> to vector<16x32xf32>
    %94 = arith.mulf %92, %93 : vector<16x32xf32>
    %95 = vector.broadcast %7 : vector<1x32xf32> to vector<16x32xf32>
    %96 = arith.addf %94, %95 : vector<16x32xf32>
    %97 = arith.truncf %96 : vector<16x32xf32> to vector<16x32xbf16>
    %c0_19 = arith.constant 0 : index
    %c0_20 = arith.constant 0 : index
    %98 = vector.load %arg4[%c0_19, %c0_20] : memref<32x128xbf16, #tpu.memory_space<vmem>>, vector<32x128xbf16>
    %cst_21 = arith.constant dense<0.000000e+00> : vector<16x128xf32>
    %99 = tpu.matmul %97, %98, %cst_21 {dimension_numbers = #tpu.dot_dimension_numbers<[1], [0], [0], [1], [0, 0, 1, 1], [], []>} : vector<16x32xbf16>, vector<32x128xbf16>, vector<16x128xf32> -> vector<16x128xf32>
    %100 = vector.broadcast %4 : vector<1x128xf32> to vector<16x128xf32>
    %101 = arith.addf %99, %100 : vector<16x128xf32>
    %cst_22 = arith.constant 5.000000e-01 : f32
    %102 = vector.broadcast %cst_22 : f32 to vector<16x128xf32>
    %103 = arith.mulf %102, %101 : vector<16x128xf32>
    %cst_23 = arith.constant 4.471500e-02 : f32
    %104 = vector.broadcast %cst_23 : f32 to vector<16x128xf32>
    %105 = arith.mulf %104, %101 : vector<16x128xf32>
    %106 = arith.mulf %105, %101 : vector<16x128xf32>
    %107 = arith.mulf %106, %101 : vector<16x128xf32>
    %108 = arith.addf %101, %107 : vector<16x128xf32>
    %cst_24 = arith.constant 0.797884583 : f32
    %109 = vector.broadcast %cst_24 : f32 to vector<16x128xf32>
    %110 = arith.mulf %109, %108 : vector<16x128xf32>
    %111 = math.tanh %110 : vector<16x128xf32>
    %cst_25 = arith.constant 1.000000e+00 : f32
    %112 = vector.broadcast %cst_25 : f32 to vector<16x128xf32>
    %113 = arith.addf %112, %111 : vector<16x128xf32>
    %114 = arith.mulf %103, %113 : vector<16x128xf32>
    %115 = arith.truncf %114 : vector<16x128xf32> to vector<16x128xbf16>
    %c0_26 = arith.constant 0 : index
    %c0_27 = arith.constant 0 : index
    %116 = vector.load %arg5[%c0_26, %c0_27] : memref<128x32xbf16, #tpu.memory_space<vmem>>, vector<128x32xbf16>
    %cst_28 = arith.constant dense<0.000000e+00> : vector<16x32xf32>
    %117 = tpu.matmul %115, %116, %cst_28 {dimension_numbers = #tpu.dot_dimension_numbers<[1], [0], [0], [1], [0, 0, 1, 1], [], []>} : vector<16x128xbf16>, vector<128x32xbf16>, vector<16x32xf32> -> vector<16x32xf32>
    %118 = vector.broadcast %8 : vector<1x32xf32> to vector<16x32xf32>
    %119 = arith.addf %117, %118 : vector<16x32xf32>
    %120 = arith.addf %119, %96 : vector<16x32xf32>
    %cst_29 = arith.constant dense<0.000000e+00> : vector<16xf32>
    %121 = vector.multi_reduction <add>, %120, %cst_29 [1] : vector<16x32xf32> to vector<16xf32>
    %122 = vector.shape_cast %121 : vector<16xf32> to vector<16x1xf32>
    %cst_30 = arith.constant 3.200000e+01 : f32
    %123 = vector.broadcast %cst_30 : f32 to vector<16x1xf32>
    %124 = arith.divf %122, %123 : vector<16x1xf32>
    %125 = vector.broadcast %124 : vector<16x1xf32> to vector<16x32xf32>
    %126 = arith.subf %120, %125 : vector<16x32xf32>
    %127 = arith.mulf %126, %126 : vector<16x32xf32>
    %cst_31 = arith.constant dense<0.000000e+00> : vector<16xf32>
    %128 = vector.multi_reduction <add>, %127, %cst_31 [1] : vector<16x32xf32> to vector<16xf32>
    %129 = vector.shape_cast %128 : vector<16xf32> to vector<16x1xf32>
    %cst_32 = arith.constant 3.200000e+01 : f32
    %130 = vector.broadcast %cst_32 : f32 to vector<16x1xf32>
    %131 = arith.divf %129, %130 : vector<16x1xf32>
    %132 = vector.broadcast %124 : vector<16x1xf32> to vector<16x32xf32>
    %133 = arith.subf %120, %132 : vector<16x32xf32>
    %cst_33 = arith.constant 9.99999996E-13 : f32
    %134 = vector.broadcast %cst_33 : f32 to vector<16x1xf32>
    %135 = arith.addf %131, %134 : vector<16x1xf32>
    %136 = math.rsqrt %135 : vector<16x1xf32>
    %137 = vector.broadcast %136 : vector<16x1xf32> to vector<16x32xf32>
    %138 = arith.mulf %133, %137 : vector<16x32xf32>
    %139 = vector.broadcast %9 : vector<1x32xf32> to vector<16x32xf32>
    %140 = arith.mulf %138, %139 : vector<16x32xf32>
    %141 = vector.broadcast %10 : vector<1x32xf32> to vector<16x32xf32>
    %142 = arith.addf %140, %141 : vector<16x32xf32>
    %c0_34 = arith.constant 0 : index
    %c0_35 = arith.constant 0 : index
    %143 = vector.load %arg7[%c0_34, %c0_35] : memref<16x32xf32, #tpu.memory_space<vmem>>, vector<16x32xf32>
    tpu.vector_store %arg7[%c0_34, %c0_35], %142 {strides = array<i32>} : memref<16x32xf32, #tpu.memory_space<vmem>>, vector<16x32xf32>,
    return
  }
}

</mosaic_0001>

<llo_original>
// kernel: tpu_custom_call.1
$region0: #{tpu_custom_call.1}
  #allocation0 [shape = 'u32[]', space=smem, size = 0x4, offset = 0x4, fixed_abs, tag = 'smem constant byte address 0x4 - core index']
  #allocation1 [shape = 'u32[144,128]{1,0:T(1,128)}', space=vmem, size = 0x12000, scoped, tag = 'internal scratch']
  %s0 = inlined_call_operand.vmem [shape: f32[16,32], index: 0, kind: input, shape index: {}]
  %s1 = inlined_call_operand.vmem [shape: f32[16,16], index: 1, kind: input, shape index: {}]
  %s2 = inlined_call_operand.vmem [shape: bf16[32,96], index: 2, kind: input, shape index: {}]
  %s3 = inlined_call_operand.vmem [shape: bf16[32,32], index: 3, kind: input, shape index: {}]
  %s4 = inlined_call_operand.vmem [shape: bf16[32,128], index: 4, kind: input, shape index: {}]
  %s5 = inlined_call_operand.vmem [shape: bf16[128,32], index: 5, kind: input, shape index: {}]
  %s6 = inlined_call_operand.hbm [shape: f32[8,128], index: 6, kind: input, shape index: {}]
  %s7 = inlined_call_operand.hbm [shape: f32[16,32], index: 7, kind: output, shape index: {}]
  %s8 = sld [smem:[#allocation0]]
  $region42: #{tpu_custom_call.1} parent=0
    _
  %s10 = ssub.s32 1, %s8
  %s11 = scalar_select 0, %s10, %s8
  $region1: #{tpu_custom_call.1} parent=0
    #allocation2 [shape = 'u8[4096]{0}', space=vmem, size = 0x1000, scoped, tag = 'input window, operand 6, single buffered']
    #allocation3 [shape = 's32[1]{0}', space=sflag, size = 0x4, scoped, tag = 'scoped memory for tpu_custom_call.1']
    #allocation4 [shape = 's32[1]{0}', space=sflag, size = 0x4, scoped, tag = 'scoped memory for tpu_custom_call.1']
    #allocation5 [shape = 'u8[8192]{0}', space=vmem, size = 0x2000, scoped, tag = 'output window, operand 0, single buffered']
    %12 = vsyncpa [#allocation3], 0
    %13 = vsyncpa [#allocation4], 0
    // Predicated region
    $region2: #{tpu_custom_call.1} parent=1 // pred_check
      _
    $region3: #{tpu_custom_call.1} parent=1 // pred_check_branch
      %15 = sbr.rel (0) target = $region5
    $region4: #{tpu_custom_call.1} parent=1 // pred_region
      _
    $region5: #{tpu_custom_call.1} parent=1 // pred_fallthru
      _
    // Predicated region
    $region6: #{tpu_custom_call.1} parent=1 // pred_check
      _
    $region7: #{tpu_custom_call.1} parent=1 // pred_check_branch
      %17 = sbr.rel (0) target = $region9
    $region8: #{tpu_custom_call.1} parent=1 // pred_region
      _
    $region9: #{tpu_custom_call.1} parent=1 // pred_fallthru
      _
    // Predicated region
    $region10: #{tpu_custom_call.1} parent=1 // pred_check
      _
    $region11: #{tpu_custom_call.1} parent=1 // pred_check_branch
      %19 = sbr.rel (0) target = $region13
    $region12: #{tpu_custom_call.1} parent=1 // pred_region
      _
    $region13: #{tpu_custom_call.1} parent=1 // pred_fallthru
      _
    // Predicated region
    $region14: #{tpu_custom_call.1} parent=1 // pred_check
      _
    $region15: #{tpu_custom_call.1} parent=1 // pred_check_branch
      %21 = sbr.rel (0) target = $region17
    $region16: #{tpu_custom_call.1} parent=1 // pred_region
      _
    $region17: #{tpu_custom_call.1} parent=1 // pred_fallthru
      _
    // Predicated region
    $region18: #{tpu_custom_call.1} parent=1 // pred_check
      _
    $region19: #{tpu_custom_call.1} parent=1 // pred_check_branch
      %23 = sbr.rel (0) target = $region21
    $region20: #{tpu_custom_call.1} parent=1 // pred_region
      _
    $region21: #{tpu_custom_call.1} parent=1 // pred_fallthru
      _
    // Predicated region
    $region22: #{tpu_custom_call.1} parent=1 // pred_check
      _
    $region23: #{tpu_custom_call.1} parent=1 // pred_check_branch
      %25 = sbr.rel (0) target = $region25
    $region24: #{tpu_custom_call.1} parent=1 // pred_region
      _
    $region25: #{tpu_custom_call.1} parent=1 // pred_fallthru
      _
    // Predicated region
    $region26: #{tpu_custom_call.1} parent=1 // pred_check
      _
    $region27: #{tpu_custom_call.1} parent=1 // pred_check_branch
      %27 = sbr.rel (0) target = $region29
    $region28: #{tpu_custom_call.1} parent=1 // pred_region
      %s29 = ssub.s32 128, 128
      %30 = vsyncadd [#allocation3], %s29
      %s32 = sshll.u32 [#allocation2], 4
      %s33 = int_to_ptr.vmem [resolvable:$true] %s32
      %35 = dma.hbm_to_vmem [thread:$0]  %s6, 128, %s33, [#allocation3]
    $region29: #{tpu_custom_call.1} parent=1 // pred_fallthru
      _
    // Predicated region
    $region30: #{tpu_custom_call.1} parent=1 // pred_check
      _
    $region31: #{tpu_custom_call.1} parent=1 // pred_check_branch
      %37 = sbr.rel (0) target = $region33
    $region32: #{tpu_custom_call.1} parent=1 // pred_region
      %38 = dma.done [#allocation3], 128
    $region33: #{tpu_custom_call.1} parent=1 // pred_fallthru
      _
    %v40 = vld [vmem:[%s0] sm:$0xff]
    %v41 = vld [vmem:[%s0 + $0x8] sm:$0xff]
    %v42 = vpack.c.bf16 %v41, %v40
    %v43 = vld [vmem:[#allocation2] sm:$0xff]
    %v44 = vld [vmem:[%s2] sm:$0xf]
    %v45 = vld [vmem:[%s2 + $0x4] sm:$0xf]
    %v46 = vld [vmem:[%s2 + $0x8] sm:$0xf]
    %v47 = vld [vmem:[%s2 + $0xc] sm:$0xf]
    %v48 = vlaneseq
    %v49 = vshrl.u32 %v48, 7
    %v50 = vsub.s32 0, %v49
    %v51 = vrot.slane %v43, %v50
    %v56 = vunpack.c.l.b16 %v44
    %v57 = vunpack.c.l.b16 %v45
    %v58 = vunpack.c.l.b16 %v46
    %v59 = vunpack.c.l.b16 %v47
    %v60 = vpack.c.b16 %v57, %v56
    %v61 = vpack.c.b16 %v59, %v58
    %vm64 = vcmask 261120
    %v66 = vsel %vm64, %v42, 0
    %68 = vmatprep.subr.bf16.mxu0 0
    %69 = vmatpush1.bf16.msra.mxu0 %v60
    %70 = vmatprep.subr.bf16.mxu0 0
    %71 = vmatpush1.bf16.msra.mxu0 %v61
    %72 = vmatprep.subr.bf16.mxu0 0
    %73 = vmatpush1.bf16.msra.mxu0 0
    %74 = vmatprep.subr.bf16.mxu0 0
    %75 = vmatpush1.bf16.msra.mxu0 0
    %76 = vmatprep.subr.bf16.mxu0 0
    %77 = vmatpush1.bf16.msra.mxu0 0
    %78 = vmatprep.subr.bf16.mxu0 0
    %79 = vmatpush1.bf16.msra.mxu0 0
    %80 = vmatprep.subr.bf16.mxu0 0
    %81 = vmatpush1.bf16.msra.mxu0 0
    %82 = vmatprep.subr.bf16.mxu0 0
    %83 = vmatpush1.bf16.msra.mxu0 0
    %84 = vmatprep.subr.bf16.mxu0 0
    %85 = vmatpush1.bf16.msra.mxu0 0
    %86 = vmatprep.subr.bf16.mxu0 0
    %87 = vmatpush1.bf16.msra.mxu0 0
    %88 = vmatprep.subr.bf16.mxu0 0
    %89 = vmatpush1.bf16.msra.mxu0 0
    %90 = vmatprep.subr.bf16.mxu0 0
    %91 = vmatpush1.bf16.msra.mxu0 0
    %92 = vmatprep.subr.bf16.mxu0 0
    %93 = vmatpush1.bf16.msra.mxu0 0
    %94 = vmatprep.subr.bf16.mxu0 0
    %95 = vmatpush1.bf16.msra.mxu0 0
    %96 = vmatprep.subr.bf16.mxu0 0
    %97 = vmatpush1.bf16.msra.mxu0 0
    %98 = vmatprep.subr.bf16.mxu0 0
    %99 = vmatpush1.bf16.msra.mxu0 0
    %100 = vmatprep.mubr.bf16.mxu0 0
    %101 = vmatmul.mubr.bf16.gmra.mrb[0].mxu0 %v66
    %v102 = vpop.f32.mrb[0].mxu0
    %v103 = vadd.f32 %v51, %v102
    %v104 = vpop.f32.mrb[0].mxu0
    %v105 = vpop.f32.mrb[0].mxu0
    %v106 = vadd.f32 %v51, %v105
    %v107 = vpop.f32.mrb[0].mxu0
    %108 = vdwg.mxu0
    %v109 = vpack.c.bf16 %v106, %v103
    %111 = vrot.lane.b32.xlu0 %v109, 120
    %v112 = vpop.permute.xlu0 %111
    %113 = vrot.lane.b32.xlu0 %v109, 112
    %v114 = vpop.permute.xlu0 %113
    %115 = vrot.lane.b32.xlu0 %v109, 104
    %v116 = vpop.permute.xlu0 %115
    %v117 = vld [vmem:[%s1] sm:$0xff]
    %v118 = vld [vmem:[%s1 + $0x8] sm:$0xff]
    %119 = vrot.lane.b32.xlu0 %v109, 96
    %v120 = vpop.permute.xlu0 %119
    %vm121 = vcmask 64512
    %v123 = vsel %vm121, %v109, 0
    %v126 = vsel %vm121, %v120, 0
    %128 = vmatprep.subr.bf16.mxu0 0
    %129 = vmatpush1.bf16.xpose.msra.mxu0 %v126
    %130 = vmatprep.subr.bf16.mxu0 0
    %131 = vmatpush1.bf16.xpose.msra.mxu0 0
    %132 = vmatprep.subr.bf16.mxu0 0
    %133 = vmatpush1.bf16.xpose.msra.mxu0 0
    %134 = vmatprep.subr.bf16.mxu0 0
    %135 = vmatpush1.bf16.xpose.msra.mxu0 0
    %136 = vmatprep.subr.bf16.mxu0 0
    %137 = vmatpush1.bf16.xpose.msra.mxu0 0
    %138 = vmatprep.subr.bf16.mxu0 0
    %139 = vmatpush1.bf16.xpose.msra.mxu0 0
    %140 = vmatprep.subr.bf16.mxu0 0
    %141 = vmatpush1.bf16.xpose.msra.mxu0 0
    %142 = vmatprep.subr.bf16.mxu0 0
    %143 = vmatpush1.bf16.xpose.msra.mxu0 0
    %144 = vmatprep.subr.bf16.mxu0 0
    %145 = vmatpush1.bf16.xpose.msra.mxu0 0
    %146 = vmatprep.subr.bf16.mxu0 0
    %147 = vmatpush1.bf16.xpose.msra.mxu0 0
    %148 = vmatprep.subr.bf16.mxu0 0
    %149 = vmatpush1.bf16.xpose.msra.mxu0 0
    %150 = vmatprep.subr.bf16.mxu0 0
    %151 = vmatpush1.bf16.xpose.msra.mxu0 0
    %152 = vmatprep.subr.bf16.mxu0 0
    %153 = vmatpush1.bf16.xpose.msra.mxu0 0
    %154 = vmatprep.subr.bf16.mxu0 0
    %155 = vmatpush1.bf16.xpose.msra.mxu0 0
    %156 = vmatprep.subr.bf16.mxu0 0
    %157 = vmatpush1.bf16.xpose.msra.mxu0 0
    %158 = vmatprep.subr.bf16.mxu0 0
    %159 = vmatpush1.bf16.xpose.msra.mxu0 0
    %160 = vmatprep.mubr.bf16.mxu0 0
    %161 = vmatmul.mubr.bf16.gmra.mrb[0].mxu0 %v123
    %v162 = vpop.f32.mrb[0].mxu0
    %v163 = vadd.f32 %v117, %v162
    %v164 = vpop.f32.mrb[0].mxu0
    %v165 = vpop.f32.mrb[0].mxu0
    %v166 = vadd.f32 %v118, %v165
    %v167 = vpop.f32.mrb[0].mxu0
    %168 = vdwg.mxu0
    %169 = vrot.lane.b32.xlu0 %v112, 96
    %v170 = vpop.permute.xlu0 %169
    %v172 = vsel %vm121, %v112, 0
    %v175 = vsel %vm121, %v170, 0
    %177 = vmatprep.subr.bf16.mxu0 0
    %178 = vmatpush1.bf16.xpose.msra.mxu0 %v175
    %179 = vmatprep.subr.bf16.mxu0 0
    %180 = vmatpush1.bf16.xpose.msra.mxu0 0
    %181 = vmatprep.subr.bf16.mxu0 0
    %182 = vmatpush1.bf16.xpose.msra.mxu0 0
    %183 = vmatprep.subr.bf16.mxu0 0
    %184 = vmatpush1.bf16.xpose.msra.mxu0 0
    %185 = vmatprep.subr.bf16.mxu0 0
    %186 = vmatpush1.bf16.xpose.msra.mxu0 0
    %187 = vmatprep.subr.bf16.mxu0 0
    %188 = vmatpush1.bf16.xpose.msra.mxu0 0
    %189 = vmatprep.subr.bf16.mxu0 0
    %190 = vmatpush1.bf16.xpose.msra.mxu0 0
    %191 = vmatprep.subr.bf16.mxu0 0
    %192 = vmatpush1.bf16.xpose.msra.mxu0 0
    %193 = vmatprep.subr.bf16.mxu0 0
    %194 = vmatpush1.bf16.xpose.msra.mxu0 0
    %195 = vmatprep.subr.bf16.mxu0 0
    %196 = vmatpush1.bf16.xpose.msra.mxu0 0
    %197 = vmatprep.subr.bf16.mxu0 0
    %198 = vmatpush1.bf16.xpose.msra.mxu0 0
    %199 = vmatprep.subr.bf16.mxu0 0
    %200 = vmatpush1.bf16.xpose.msra.mxu0 0
    %201 = vmatprep.subr.bf16.mxu0 0
    %202 = vmatpush1.bf16.xpose.msra.mxu0 0
    %203 = vmatprep.subr.bf16.mxu0 0
    %204 = vmatpush1.bf16.xpose.msra.mxu0 0
    %205 = vmatprep.subr.bf16.mxu0 0
    %206 = vmatpush1.bf16.xpose.msra.mxu0 0
    %207 = vmatprep.subr.bf16.mxu0 0
    %208 = vmatpush1.bf16.xpose.msra.mxu0 0
    %209 = vmatprep.mubr.bf16.mxu0 0
    %210 = vmatmul.mubr.bf16.gmra.mrb[0].mxu0 %v172
    %v211 = vpop.f32.mrb[0].mxu0
    %v212 = vadd.f32 %v117, %v211
    %v213 = vpop.f32.mrb[0].mxu0
    %v214 = vpop.f32.mrb[0].mxu0
    %v215 = vadd.f32 %v118, %v214
    %v216 = vpop.f32.mrb[0].mxu0
    %217 = vdwg.mxu0
    %218 = vrot.lane.b32.xlu0 %v114, 96
    %v219 = vpop.permute.xlu0 %218
    %v221 = vsel %vm121, %v114, 0
    %v224 = vsel %vm121, %v219, 0
    %226 = vmatprep.subr.bf16.mxu0 0
    %227 = vmatpush1.bf16.xpose.msra.mxu0 %v224
    %228 = vmatprep.subr.bf16.mxu0 0
    %229 = vmatpush1.bf16.xpose.msra.mxu0 0
    %230 = vmatprep.subr.bf16.mxu0 0
    %231 = vmatpush1.bf16.xpose.msra.mxu0 0
    %232 = vmatprep.subr.bf16.mxu0 0
    %233 = vmatpush1.bf16.xpose.msra.mxu0 0
    %234 = vmatprep.subr.bf16.mxu0 0
    %235 = vmatpush1.bf16.xpose.msra.mxu0 0
    %236 = vmatprep.subr.bf16.mxu0 0
    %237 = vmatpush1.bf16.xpose.msra.mxu0 0
    %238 = vmatprep.subr.bf16.mxu0 0
    %239 = vmatpush1.bf16.xpose.msra.mxu0 0
    %240 = vmatprep.subr.bf16.mxu0 0
    %241 = vmatpush1.bf16.xpose.msra.mxu0 0
    %242 = vmatprep.subr.bf16.mxu0 0
    %243 = vmatpush1.bf16.xpose.msra.mxu0 0
    %244 = vmatprep.subr.bf16.mxu0 0
    %245 = vmatpush1.bf16.xpose.msra.mxu0 0
    %246 = vmatprep.subr.bf16.mxu0 0
    %247 = vmatpush1.bf16.xpose.msra.mxu0 0
    %248 = vmatprep.subr.bf16.mxu0 0
    %249 = vmatpush1.bf16.xpose.msra.mxu0 0
    %250 = vmatprep.subr.bf16.mxu0 0
    %251 = vmatpush1.bf16.xpose.msra.mxu0 0
    %252 = vmatprep.subr.bf16.mxu0 0
    %253 = vmatpush1.bf16.xpose.msra.mxu0 0
    %254 = vmatprep.subr.bf16.mxu0 0
    %255 = vmatpush1.bf16.xpose.msra.mxu0 0
    %256 = vmatprep.subr.bf16.mxu0 0
    %257 = vmatpush1.bf16.xpose.msra.mxu0 0
    %258 = vmatprep.mubr.bf16.mxu0 0
    %259 = vmatmul.mubr.bf16.gmra.mrb[0].mxu0 %v221
    %v260 = vpop.f32.mrb[0].mxu0
    %v261 = vadd.f32 %v117, %v260
    %v262 = vpop.f32.mrb[0].mxu0
    %v263 = vpop.f32.mrb[0].mxu0
    %v264 = vadd.f32 %v118, %v263
    %v265 = vpop.f32.mrb[0].mxu0
    %266 = vdwg.mxu0
    %267 = vrot.lane.b32.xlu0 %v116, 96
    %v268 = vpop.permute.xlu0 %267
    %v270 = vsel %vm121, %v116, 0
    %v273 = vsel %vm121, %v268, 0
    %275 = vmatprep.subr.bf16.mxu0 0
    %276 = vmatpush1.bf16.xpose.msra.mxu0 %v273
    %277 = vmatprep.subr.bf16.mxu0 0
    %278 = vmatpush1.bf16.xpose.msra.mxu0 0
    %279 = vmatprep.subr.bf16.mxu0 0
    %280 = vmatpush1.bf16.xpose.msra.mxu0 0
    %281 = vmatprep.subr.bf16.mxu0 0
    %282 = vmatpush1.bf16.xpose.msra.mxu0 0
    %283 = vmatprep.subr.bf16.mxu0 0
    %284 = vmatpush1.bf16.xpose.msra.mxu0 0
    %285 = vmatprep.subr.bf16.mxu0 0
    %286 = vmatpush1.bf16.xpose.msra.mxu0 0
    %287 = vmatprep.subr.bf16.mxu0 0
    %288 = vmatpush1.bf16.xpose.msra.mxu0 0
    %289 = vmatprep.subr.bf16.mxu0 0
    %290 = vmatpush1.bf16.xpose.msra.mxu0 0
    %291 = vmatprep.subr.bf16.mxu0 0
    %292 = vmatpush1.bf16.xpose.msra.mxu0 0
    %293 = vmatprep.subr.bf16.mxu0 0
    %294 = vmatpush1.bf16.xpose.msra.mxu0 0
    %295 = vmatprep.subr.bf16.mxu0 0
    %296 = vmatpush1.bf16.xpose.msra.mxu0 0
    %297 = vmatprep.subr.bf16.mxu0 0
    %298 = vmatpush1.bf16.xpose.msra.mxu0 0
    %299 = vmatprep.subr.bf16.mxu0 0
    %300 = vmatpush1.bf16.xpose.msra.mxu0 0
    %301 = vmatprep.subr.bf16.mxu0 0
    %302 = vmatpush1.bf16.xpose.msra.mxu0 0
    %303 = vmatprep.subr.bf16.mxu0 0
    %304 = vmatpush1.bf16.xpose.msra.mxu0 0
    %305 = vmatprep.subr.bf16.mxu0 0
    %306 = vmatpush1.bf16.xpose.msra.mxu0 0
    %307 = vmatprep.mubr.bf16.mxu0 0
    %308 = vmatmul.mubr.bf16.gmra.mrb[0].mxu0 %v270
    %v309 = vpop.f32.mrb[0].mxu0
    %v310 = vadd.f32 %v117, %v309
    %v311 = vpop.f32.mrb[0].mxu0
    %v312 = vpop.f32.mrb[0].mxu0
    %v313 = vadd.f32 %v118, %v312
    %v314 = vpop.f32.mrb[0].mxu0
    %315 = vdwg.mxu0
    %vm316 = vcmask 130048
    %v317 = vsel %vm316, %v163, -inf
    %318 = vmax.xlane.f32.xlu0 %v317
    %v319 = vpop.xlane.xlu0 %318
    %v320 = vsel %vm316, %v166, -inf
    %321 = vmax.xlane.f32.xlu0 %v320
    %v322 = vpop.xlane.xlu0 %321
    %v323 = vsel %vm316, %v212, -inf
    %324 = vmax.xlane.f32.xlu0 %v323
    %v325 = vpop.xlane.xlu0 %324
    %v326 = vsel %vm316, %v215, -inf
    %327 = vmax.xlane.f32.xlu0 %v326
    %v328 = vpop.xlane.xlu0 %327
    %v329 = vsel %vm316, %v261, -inf
    %330 = vmax.xlane.f32.xlu0 %v329
    %v331 = vpop.xlane.xlu0 %330
    %v332 = vsel %vm316, %v264, -inf
    %333 = vmax.xlane.f32.xlu0 %v332
    %v334 = vpop.xlane.xlu0 %333
    %v335 = vsel %vm316, %v310, -inf
    %336 = vmax.xlane.f32.xlu0 %v335
    %v337 = vpop.xlane.xlu0 %336
    %v338 = vsel %vm316, %v313, -inf
    %339 = vmax.xlane.f32.xlu0 %v338
    %v340 = vpop.xlane.xlu0 %339
    %v341 = vsub.f32 %v163, %v319
    %v342 = vsub.f32 %v166, %v322
    %v343 = vsub.f32 %v212, %v325
    %v344 = vsub.f32 %v215, %v328
    %v345 = vsub.f32 %v261, %v331
    %v346 = vsub.f32 %v264, %v334
    %v347 = vsub.f32 %v310, %v337
    %v348 = vsub.f32 %v313, %v340
    %v349 = vmul.f32 %v341, 1.442695
    %v350 = vpow.pop %v349
    %v351 = vmul.f32 %v342, 1.442695
    %v352 = vpow.pop %v351
    %v353 = vmul.f32 %v343, 1.442695
    %v354 = vpow.pop %v353
    %v355 = vmul.f32 %v344, 1.442695
    %v356 = vpow.pop %v355
    %v357 = vmul.f32 %v345, 1.442695
    %v358 = vpow.pop %v357
    %v359 = vmul.f32 %v346, 1.442695
    %v360 = vpow.pop %v359
    %v361 = vmul.f32 %v347, 1.442695
    %v362 = vpow.pop %v361
    %v363 = vmul.f32 %v348, 1.442695
    %v364 = vpow.pop %v363
    %v365 = vsel %vm316, %v350, 0.0
    %366 = vadd.xlane.f32.xlu0 %v365
    %v367 = vpop.xlane.xlu0 %366
    %v368 = vsel %vm316, %v352, 0.0
    %369 = vadd.xlane.f32.xlu0 %v368
    %v370 = vpop.xlane.xlu0 %369
    %v371 = vsel %vm316, %v354, 0.0
    %372 = vadd.xlane.f32.xlu0 %v371
    %v373 = vpop.xlane.xlu0 %372
    %v374 = vsel %vm316, %v356, 0.0
    %375 = vadd.xlane.f32.xlu0 %v374
    %v376 = vpop.xlane.xlu0 %375
    %v377 = vsel %vm316, %v358, 0.0
    %378 = vadd.xlane.f32.xlu0 %v377
    %v379 = vpop.xlane.xlu0 %378
    %v380 = vsel %vm316, %v360, 0.0
    %381 = vadd.xlane.f32.xlu0 %v380
    %v382 = vpop.xlane.xlu0 %381
    %v383 = vsel %vm316, %v362, 0.0
    %384 = vadd.xlane.f32.xlu0 %v383
    %v385 = vpop.xlane.xlu0 %384
    %v386 = vsel %vm316, %v364, 0.0
    %387 = vadd.xlane.f32.xlu0 %v386
    %v388 = vpop.xlane.xlu0 %387
    %v389 = vrcp.pop %v367
    %v390 = vrcp.pop %v370
    %v391 = vrcp.pop %v373
    %v392 = vrcp.pop %v376
    %v393 = vrcp.pop %v379
    %v394 = vrcp.pop %v382
    %v395 = vrcp.pop %v385
    %v396 = vrcp.pop %v388
    %v397 = vmul.f32 %v350, %v389
    %v398 = vmul.f32 %v352, %v390
    %v399 = vmul.f32 %v354, %v391
    %v400 = vmul.f32 %v356, %v392
    %v401 = vmul.f32 %v358, %v393
    %v402 = vmul.f32 %v360, %v394
    %v403 = vmul.f32 %v362, %v395
    %v404 = vmul.f32 %v364, %v396
    %v405 = vpack.c.bf16 %v398, %v397
    %v406 = vpack.c.bf16 %v400, %v399
    %v407 = vpack.c.bf16 %v402, %v401
    %v408 = vpack.c.bf16 %v404, %v403
    %409 = vrot.lane.b32.xlu0 %v109, 64
    %v410 = vpop.permute.xlu0 %409
    %v413 = vsel %vm316, %v405, 0
    %415 = vmatprep.subr.bf16.mxu0 0
    %416 = vmatpush1.bf16.msra.mxu0 %v410
    %417 = vmatprep.subr.bf16.mxu0 0
    %418 = vmatpush1.bf16.msra.mxu0 0
    %419 = vmatprep.subr.bf16.mxu0 0
    %420 = vmatpush1.bf16.msra.mxu0 0
    %421 = vmatprep.subr.bf16.mxu0 0
    %422 = vmatpush1.bf16.msra.mxu0 0
    %423 = vmatprep.subr.bf16.mxu0 0
    %424 = vmatpush1.bf16.msra.mxu0 0
    %425 = vmatprep.subr.bf16.mxu0 0
    %426 = vmatpush1.bf16.msra.mxu0 0
    %427 = vmatprep.subr.bf16.mxu0 0
    %428 = vmatpush1.bf16.msra.mxu0 0
    %429 = vmatprep.subr.bf16.mxu0 0
    %430 = vmatpush1.bf16.msra.mxu0 0
    %431 = vmatprep.subr.bf16.mxu0 0
    %432 = vmatpush1.bf16.msra.mxu0 0
    %433 = vmatprep.subr.bf16.mxu0 0
    %434 = vmatpush1.bf16.msra.mxu0 0
    %435 = vmatprep.subr.bf16.mxu0 0
    %436 = vmatpush1.bf16.msra.mxu0 0
    %437 = vmatprep.subr.bf16.mxu0 0
    %438 = vmatpush1.bf16.msra.mxu0 0
    %439 = vmatprep.subr.bf16.mxu0 0
    %440 = vmatpush1.bf16.msra.mxu0 0
    %441 = vmatprep.subr.bf16.mxu0 0
    %442 = vmatpush1.bf16.msra.mxu0 0
    %443 = vmatprep.subr.bf16.mxu0 0
    %444 = vmatpush1.bf16.msra.mxu0 0
    %445 = vmatprep.subr.bf16.mxu0 0
    %446 = vmatpush1.bf16.msra.mxu0 0
    %447 = vmatprep.mubr.bf16.mxu0 0
    %448 = vmatmul.mubr.bf16.gmra.mrb[0].mxu0 %v413
    %v449 = vpop.f32.mrb[0].mxu0
    %v450 = vadd.f32 0.0, %v449
    %v451 = vpop.f32.mrb[0].mxu0
    %v452 = vpop.f32.mrb[0].mxu0
    %v453 = vadd.f32 0.0, %v452
    %v454 = vpop.f32.mrb[0].mxu0
    %455 = vdwg.mxu0
    %456 = vrot.lane.b32.xlu0 %v112, 64
    %v457 = vpop.permute.xlu0 %456
    %v460 = vsel %vm316, %v406, 0
    %462 = vmatprep.subr.bf16.mxu0 0
    %463 = vmatpush1.bf16.msra.mxu0 %v457
    %464 = vmatprep.subr.bf16.mxu0 0
    %465 = vmatpush1.bf16.msra.mxu0 0
    %466 = vmatprep.subr.bf16.mxu0 0
    %467 = vmatpush1.bf16.msra.mxu0 0
    %468 = vmatprep.subr.bf16.mxu0 0
    %469 = vmatpush1.bf16.msra.mxu0 0
    %470 = vmatprep.subr.bf16.mxu0 0
    %471 = vmatpush1.bf16.msra.mxu0 0
    %472 = vmatprep.subr.bf16.mxu0 0
    %473 = vmatpush1.bf16.msra.mxu0 0
    %474 = vmatprep.subr.bf16.mxu0 0
    %475 = vmatpush1.bf16.msra.mxu0 0
    %476 = vmatprep.subr.bf16.mxu0 0
    %477 = vmatpush1.bf16.msra.mxu0 0
    %478 = vmatprep.subr.bf16.mxu0 0
    %479 = vmatpush1.bf16.msra.mxu0 0
    %480 = vmatprep.subr.bf16.mxu0 0
    %481 = vmatpush1.bf16.msra.mxu0 0
    %482 = vmatprep.subr.bf16.mxu0 0
    %483 = vmatpush1.bf16.msra.mxu0 0
    %484 = vmatprep.subr.bf16.mxu0 0
    %485 = vmatpush1.bf16.msra.mxu0 0
    %486 = vmatprep.subr.bf16.mxu0 0
    %487 = vmatpush1.bf16.msra.mxu0 0
    %488 = vmatprep.subr.bf16.mxu0 0
    %489 = vmatpush1.bf16.msra.mxu0 0
    %490 = vmatprep.subr.bf16.mxu0 0
    %491 = vmatpush1.bf16.msra.mxu0 0
    %492 = vmatprep.subr.bf16.mxu0 0
    %493 = vmatpush1.bf16.msra.mxu0 0
    %494 = vmatprep.mubr.bf16.mxu0 0
    %495 = vmatmul.mubr.bf16.gmra.mrb[0].mxu0 %v460
    %v496 = vpop.f32.mrb[0].mxu0
    %v497 = vadd.f32 0.0, %v496
    %v498 = vpop.f32.mrb[0].mxu0
    %v499 = vpop.f32.mrb[0].mxu0
    %v500 = vadd.f32 0.0, %v499
    %v501 = vpop.f32.mrb[0].mxu0
    %502 = vdwg.mxu0
    %503 = vrot.lane.b32.xlu0 %v114, 64
    %v504 = vpop.permute.xlu0 %503
    %v507 = vsel %vm316, %v407, 0
    %509 = vmatprep.subr.bf16.mxu0 0
    %510 = vmatpush1.bf16.msra.mxu0 %v504
    %511 = vmatprep.subr.bf16.mxu0 0
    %512 = vmatpush1.bf16.msra.mxu0 0
    %513 = vmatprep.subr.bf16.mxu0 0
    %514 = vmatpush1.bf16.msra.mxu0 0
    %515 = vmatprep.subr.bf16.mxu0 0
    %516 = vmatpush1.bf16.msra.mxu0 0
    %517 = vmatprep.subr.bf16.mxu0 0
    %518 = vmatpush1.bf16.msra.mxu0 0
    %519 = vmatprep.subr.bf16.mxu0 0
    %520 = vmatpush1.bf16.msra.mxu0 0
    %521 = vmatprep.subr.bf16.mxu0 0
    %522 = vmatpush1.bf16.msra.mxu0 0
    %523 = vmatprep.subr.bf16.mxu0 0
    %524 = vmatpush1.bf16.msra.mxu0 0
    %525 = vmatprep.subr.bf16.mxu0 0
    %526 = vmatpush1.bf16.msra.mxu0 0
    %527 = vmatprep.subr.bf16.mxu0 0
    %528 = vmatpush1.bf16.msra.mxu0 0
    %529 = vmatprep.subr.bf16.mxu0 0
    %530 = vmatpush1.bf16.msra.mxu0 0
    %531 = vmatprep.subr.bf16.mxu0 0
    %532 = vmatpush1.bf16.msra.mxu0 0
    %533 = vmatprep.subr.bf16.mxu0 0
    %534 = vmatpush1.bf16.msra.mxu0 0
    %535 = vmatprep.subr.bf16.mxu0 0
    %536 = vmatpush1.bf16.msra.mxu0 0
    %537 = vmatprep.subr.bf16.mxu0 0
    %538 = vmatpush1.bf16.msra.mxu0 0
    %539 = vmatprep.subr.bf16.mxu0 0
    %540 = vmatpush1.bf16.msra.mxu0 0
    %541 = vmatprep.mubr.bf16.mxu0 0
    %542 = vmatmul.mubr.bf16.gmra.mrb[0].mxu0 %v507
    %v543 = vpop.f32.mrb[0].mxu0
    %v544 = vadd.f32 0.0, %v543
    %v545 = vpop.f32.mrb[0].mxu0
    %v546 = vpop.f32.mrb[0].mxu0
    %v547 = vadd.f32 0.0, %v546
    %v548 = vpop.f32.mrb[0].mxu0
    %549 = vdwg.mxu0
    %550 = vrot.lane.b32.xlu0 %v116, 64
    %v551 = vpop.permute.xlu0 %550
    %v554 = vsel %vm316, %v408, 0
    %556 = vmatprep.subr.bf16.mxu0 0
    %557 = vmatpush1.bf16.msra.mxu0 %v551
    %558 = vmatprep.subr.bf16.mxu0 0
    %559 = vmatpush1.bf16.msra.mxu0 0
    %560 = vmatprep.subr.bf16.mxu0 0
    %561 = vmatpush1.bf16.msra.mxu0 0
    %562 = vmatprep.subr.bf16.mxu0 0
    %563 = vmatpush1.bf16.msra.mxu0 0
    %564 = vmatprep.subr.bf16.mxu0 0
    %565 = vmatpush1.bf16.msra.mxu0 0
    %566 = vmatprep.subr.bf16.mxu0 0
    %567 = vmatpush1.bf16.msra.mxu0 0
    %568 = vmatprep.subr.bf16.mxu0 0
    %569 = vmatpush1.bf16.msra.mxu0 0
    %570 = vmatprep.subr.bf16.mxu0 0
    %571 = vmatpush1.bf16.msra.mxu0 0
    %572 = vmatprep.subr.bf16.mxu0 0
    %573 = vmatpush1.bf16.msra.mxu0 0
    %574 = vmatprep.subr.bf16.mxu0 0
    %575 = vmatpush1.bf16.msra.mxu0 0
    %576 = vmatprep.subr.bf16.mxu0 0
    %577 = vmatpush1.bf16.msra.mxu0 0
    %578 = vmatprep.subr.bf16.mxu0 0
    %579 = vmatpush1.bf16.msra.mxu0 0
    %580 = vmatprep.subr.bf16.mxu0 0
    %581 = vmatpush1.bf16.msra.mxu0 0
    %582 = vmatprep.subr.bf16.mxu0 0
    %583 = vmatpush1.bf16.msra.mxu0 0
    %584 = vmatprep.subr.bf16.mxu0 0
    %585 = vmatpush1.bf16.msra.mxu0 0
    %586 = vmatprep.subr.bf16.mxu0 0
    %587 = vmatpush1.bf16.msra.mxu0 0
    %588 = vmatprep.mubr.bf16.mxu0 0
    %589 = vmatmul.mubr.bf16.gmra.mrb[0].mxu0 %v554
    %v590 = vpop.f32.mrb[0].mxu0
    %v591 = vadd.f32 0.0, %v590
    %v592 = vpop.f32.mrb[0].mxu0
    %v593 = vpop.f32.mrb[0].mxu0
    %v594 = vadd.f32 0.0, %v593
    %v595 = vpop.f32.mrb[0].mxu0
    %596 = vdwg.mxu0
    %599 = vrot.lane.b32.xlu0 %v497, 8
    %v600 = vpop.permute.xlu0 %599
    %601 = vrot.lane.b32.xlu0 %v500, 8
    %v602 = vpop.permute.xlu0 %601
    %607 = vrot.lane.b32.xlu0 %v544, 16
    %v608 = vpop.permute.xlu0 %607
    %609 = vrot.lane.b32.xlu0 %v547, 16
    %v610 = vpop.permute.xlu0 %609
    %615 = vrot.lane.b32.xlu0 %v591, 24
    %v616 = vpop.permute.xlu0 %615
    %617 = vrot.lane.b32.xlu0 %v594, 24
    %v618 = vpop.permute.xlu0 %617
    %v621 = vsel %vm121, %v450, %v600
    %v622 = vsel %vm121, %v453, %v602
    %v623 = vsel %vm316, %v621, %v608
    %v624 = vsel %vm316, %v622, %v610
    %vm625 = vcmask 195584
    %v626 = vsel %vm625, %v623, %v616
    %v627 = vsel %vm625, %v624, %v618
    %v628 = vpack.c.bf16 %v627, %v626
    %v629 = vld [vmem:[%s3] sm:$0xf]
    %v630 = vld [vmem:[%s3 + $0x4] sm:$0xf]
    %v631 = vld [vmem:[%s3 + $0x8] sm:$0xf]
    %v632 = vld [vmem:[%s3 + $0xc] sm:$0xf]
    %v633 = vlaneseq
    %v634 = vshrl.u32 %v633, 7
    %v635 = vsub.s32 2, %v634
    %v636 = vrot.slane %v43, %v635
    %v641 = vunpack.c.l.b16 %v629
    %v642 = vunpack.c.l.b16 %v630
    %v643 = vunpack.c.l.b16 %v631
    %v644 = vunpack.c.l.b16 %v632
    %v645 = vpack.c.b16 %v642, %v641
    %v646 = vpack.c.b16 %v644, %v643
    %v650 = vsel %vm64, %v628, 0
    %652 = vmatprep.subr.bf16.mxu0 0
    %653 = vmatpush1.bf16.msra.mxu0 %v645
    %654 = vmatprep.subr.bf16.mxu0 0
    %655 = vmatpush1.bf16.msra.mxu0 %v646
    %656 = vmatprep.subr.bf16.mxu0 0
    %657 = vmatpush1.bf16.msra.mxu0 0
    %658 = vmatprep.subr.bf16.mxu0 0
    %659 = vmatpush1.bf16.msra.mxu0 0
    %660 = vmatprep.subr.bf16.mxu0 0
    %661 = vmatpush1.bf16.msra.mxu0 0
    %662 = vmatprep.subr.bf16.mxu0 0
    %663 = vmatpush1.bf16.msra.mxu0 0
    %664 = vmatprep.subr.bf16.mxu0 0
    %665 = vmatpush1.bf16.msra.mxu0 0
    %666 = vmatprep.subr.bf16.mxu0 0
    %667 = vmatpush1.bf16.msra.mxu0 0
    %668 = vmatprep.subr.bf16.mxu0 0
    %669 = vmatpush1.bf16.msra.mxu0 0
    %670 = vmatprep.subr.bf16.mxu0 0
    %671 = vmatpush1.bf16.msra.mxu0 0
    %672 = vmatprep.subr.bf16.mxu0 0
    %673 = vmatpush1.bf16.msra.mxu0 0
    %674 = vmatprep.subr.bf16.mxu0 0
    %675 = vmatpush1.bf16.msra.mxu0 0
    %676 = vmatprep.subr.bf16.mxu0 0
    %677 = vmatpush1.bf16.msra.mxu0 0
    %678 = vmatprep.subr.bf16.mxu0 0
    %679 = vmatpush1.bf16.msra.mxu0 0
    %680 = vmatprep.subr.bf16.mxu0 0
    %681 = vmatpush1.bf16.msra.mxu0 0
    %682 = vmatprep.subr.bf16.mxu0 0
    %683 = vmatpush1.bf16.msra.mxu0 0
    %684 = vmatprep.mubr.bf16.mxu0 0
    %685 = vmatmul.mubr.bf16.gmra.mrb[0].mxu0 %v650
    %v686 = vpop.f32.mrb[0].mxu0
    %v687 = vadd.f32 %v636, %v686
    %v688 = vpop.f32.mrb[0].mxu0
    %v689 = vpop.f32.mrb[0].mxu0
    %v690 = vadd.f32 %v636, %v689
    %v691 = vpop.f32.mrb[0].mxu0
    %692 = vdwg.mxu0
    %v693 = vadd.f32 %v687, %v40
    %v694 = vadd.f32 %v690, %v41
    %v695 = vsel %vm64, %v693, 0.0
    %696 = vadd.xlane.f32.xlu0 %v695
    %v697 = vpop.xlane.xlu0 %696
    %v698 = vsel %vm64, %v694, 0.0
    %699 = vadd.xlane.f32.xlu0 %v698
    %v700 = vpop.xlane.xlu0 %699
    %v701 = vrcp.pop 32.0
    %v702 = vmul.f32 %v697, %v701
    %v703 = vmul.f32 %v700, %v701
    %v704 = vsub.f32 %v693, %v702
    %v705 = vsub.f32 %v694, %v703
    %v706 = vmul.f32 %v704, %v704
    %v707 = vmul.f32 %v705, %v705
    %v708 = vsel %vm64, %v706, 0.0
    %709 = vadd.xlane.f32.xlu0 %v708
    %v710 = vpop.xlane.xlu0 %709
    %v711 = vsel %vm64, %v707, 0.0
    %712 = vadd.xlane.f32.xlu0 %v711
    %v713 = vpop.xlane.xlu0 %712
    %v714 = vmul.f32 %v710, %v701
    %v715 = vmul.f32 %v713, %v701
    %v716 = vadd.f32 %v714, 1e-12
    %v717 = vadd.f32 %v715, 1e-12
    %v718 = vrsqrt.pop %v716
    %v719 = vrsqrt.pop %v717
    %v720 = vmul.f32 %v704, %v718
    %v721 = vmul.f32 %v705, %v719
    %v722 = vlaneseq
    %v723 = vshrl.u32 %v722, 7
    %v724 = vsub.s32 3, %v723
    %v725 = vrot.slane %v43, %v724
    %v726 = vmul.f32 %v720, %v725
    %v727 = vmul.f32 %v721, %v725
    %v728 = vlaneseq
    %v729 = vshrl.u32 %v728, 7
    %v730 = vsub.s32 4, %v729
    %v731 = vrot.slane %v43, %v730
    %v732 = vadd.f32 %v726, %v731
    %v733 = vadd.f32 %v727, %v731
    %v734 = vpack.c.bf16 %v733, %v732
    %v735 = vld [vmem:[%s4] sm:$0xf]
    %v736 = vld [vmem:[%s4 + $0x4] sm:$0xf]
    %v737 = vld [vmem:[%s4 + $0x8] sm:$0xf]
    %v738 = vld [vmem:[%s4 + $0xc] sm:$0xf]
    %v739 = vlaneseq
    %v740 = vshrl.u32 %v739, 7
    %v741 = vsub.s32 1, %v740
    %v742 = vrot.slane %v43, %v741
    %v747 = vunpack.c.l.b16 %v735
    %v748 = vunpack.c.l.b16 %v736
    %v749 = vunpack.c.l.b16 %v737
    %v750 = vunpack.c.l.b16 %v738
    %v751 = vpack.c.b16 %v748, %v747
    %v752 = vpack.c.b16 %v750, %v749
    %v756 = vsel %vm64, %v734, 0
    %758 = vmatprep.subr.bf16.mxu0 0
    %759 = vmatpush1.bf16.msra.mxu0 %v751
    %760 = vmatprep.subr.bf16.mxu0 0
    %761 = vmatpush1.bf16.msra.mxu0 %v752
    %762 = vmatprep.subr.bf16.mxu0 0
    %763 = vmatpush1.bf16.msra.mxu0 0
    %764 = vmatprep.subr.bf16.mxu0 0
    %765 = vmatpush1.bf16.msra.mxu0 0
    %766 = vmatprep.subr.bf16.mxu0 0
    %767 = vmatpush1.bf16.msra.mxu0 0
    %768 = vmatprep.subr.bf16.mxu0 0
    %769 = vmatpush1.bf16.msra.mxu0 0
    %770 = vmatprep.subr.bf16.mxu0 0
    %771 = vmatpush1.bf16.msra.mxu0 0
    %772 = vmatprep.subr.bf16.mxu0 0
    %773 = vmatpush1.bf16.msra.mxu0 0
    %774 = vmatprep.subr.bf16.mxu0 0
    %775 = vmatpush1.bf16.msra.mxu0 0
    %776 = vmatprep.subr.bf16.mxu0 0
    %777 = vmatpush1.bf16.msra.mxu0 0
    %778 = vmatprep.subr.bf16.mxu0 0
    %779 = vmatpush1.bf16.msra.mxu0 0
    %780 = vmatprep.subr.bf16.mxu0 0
    %781 = vmatpush1.bf16.msra.mxu0 0
    %782 = vmatprep.subr.bf16.mxu0 0
    %783 = vmatpush1.bf16.msra.mxu0 0
    %784 = vmatprep.subr.bf16.mxu0 0
    %785 = vmatpush1.bf16.msra.mxu0 0
    %786 = vmatprep.subr.bf16.mxu0 0
    %787 = vmatpush1.bf16.msra.mxu0 0
    %788 = vmatprep.subr.bf16.mxu0 0
    %789 = vmatpush1.bf16.msra.mxu0 0
    %790 = vmatprep.mubr.bf16.mxu0 0
    %791 = vmatmul.mubr.bf16.gmra.mrb[0].mxu0 %v756
    %v792 = vpop.f32.mrb[0].mxu0
    %v793 = vadd.f32 %v742, %v792
    %v794 = vpop.f32.mrb[0].mxu0
    %v795 = vpop.f32.mrb[0].mxu0
    %v796 = vadd.f32 %v742, %v795
    %v797 = vpop.f32.mrb[0].mxu0
    %798 = vdwg.mxu0
    %v799 = vmul.f32 %v793, 0.5
    %v800 = vmul.f32 %v796, 0.5
    %v801 = vmul.f32 %v793, 0.044715
    %v802 = vmul.f32 %v796, 0.044715
    %v803 = vmul.f32 %v801, %v793
    %v804 = vmul.f32 %v802, %v796
    %v805 = vmul.f32 %v803, %v793
    %v806 = vmul.f32 %v804, %v796
    %v807 = vadd.f32 %v793, %v805
    %v808 = vadd.f32 %v796, %v806
    %v809 = vmul.f32 %v807, 0.7978846
    %v810 = vmul.f32 %v808, 0.7978846
    %v811 = vtanh.pop %v809
    %v812 = vtanh.pop %v810
    %v813 = vadd.f32 %v811, 1.0
    %v814 = vadd.f32 %v812, 1.0
    %v815 = vmul.f32 %v799, %v813
    %v816 = vmul.f32 %v800, %v814
    %v817 = vpack.c.bf16 %v816, %v815
    %v818 = vld [vmem:[%s5] sm:$0xf]
    %v819 = vld [vmem:[%s5 + $0x4] sm:$0xf]
    %v820 = vld [vmem:[%s5 + $0x8] sm:$0xf]
    %v821 = vld [vmem:[%s5 + $0xc] sm:$0xf]
    %v822 = vld [vmem:[%s5 + $0x10] sm:$0xf]
    %v823 = vld [vmem:[%s5 + $0x14] sm:$0xf]
    %v824 = vld [vmem:[%s5 + $0x18] sm:$0xf]
    %v825 = vld [vmem:[%s5 + $0x1c] sm:$0xf]
    %v826 = vld [vmem:[%s5 + $0x20] sm:$0xf]
    %v827 = vld [vmem:[%s5 + $0x24] sm:$0xf]
    %v828 = vld [vmem:[%s5 + $0x28] sm:$0xf]
    %v829 = vld [vmem:[%s5 + $0x2c] sm:$0xf]
    %v830 = vld [vmem:[%s5 + $0x30] sm:$0xf]
    %v831 = vld [vmem:[%s5 + $0x34] sm:$0xf]
    %v832 = vld [vmem:[%s5 + $0x38] sm:$0xf]
    %v833 = vld [vmem:[%s5 + $0x3c] sm:$0xf]
    %v834 = vlaneseq
    %v835 = vshrl.u32 %v834, 7
    %v836 = vsub.s32 5, %v835
    %v837 = vrot.slane %v43, %v836
    %v854 = vunpack.c.l.b16 %v818
    %v855 = vunpack.c.l.b16 %v819
    %v856 = vunpack.c.l.b16 %v820
    %v857 = vunpack.c.l.b16 %v821
    %v858 = vunpack.c.l.b16 %v822
    %v859 = vunpack.c.l.b16 %v823
    %v860 = vunpack.c.l.b16 %v824
    %v861 = vunpack.c.l.b16 %v825
    %v862 = vunpack.c.l.b16 %v826
    %v863 = vunpack.c.l.b16 %v827
    %v864 = vunpack.c.l.b16 %v828
    %v865 = vunpack.c.l.b16 %v829
    %v866 = vunpack.c.l.b16 %v830
    %v867 = vunpack.c.l.b16 %v831
    %v868 = vunpack.c.l.b16 %v832
    %v869 = vunpack.c.l.b16 %v833
    %v870 = vpack.c.b16 %v855, %v854
    %v871 = vpack.c.b16 %v857, %v856
    %v872 = vpack.c.b16 %v859, %v858
    %v873 = vpack.c.b16 %v861, %v860
    %v874 = vpack.c.b16 %v863, %v862
    %v875 = vpack.c.b16 %v865, %v864
    %v876 = vpack.c.b16 %v867, %v866
    %v877 = vpack.c.b16 %v869, %v868
    %886 = vmatprep.subr.bf16.mxu0 0
    %887 = vmatpush1.bf16.msra.mxu0 %v870
    %888 = vmatprep.subr.bf16.mxu0 0
    %889 = vmatpush1.bf16.msra.mxu0 %v871
    %890 = vmatprep.subr.bf16.mxu0 0
    %891 = vmatpush1.bf16.msra.mxu0 %v872
    %892 = vmatprep.subr.bf16.mxu0 0
    %893 = vmatpush1.bf16.msra.mxu0 %v873
    %894 = vmatprep.subr.bf16.mxu0 0
    %895 = vmatpush1.bf16.msra.mxu0 %v874
    %896 = vmatprep.subr.bf16.mxu0 0
    %897 = vmatpush1.bf16.msra.mxu0 %v875
    %898 = vmatprep.subr.bf16.mxu0 0
    %899 = vmatpush1.bf16.msra.mxu0 %v876
    %900 = vmatprep.subr.bf16.mxu0 0
    %901 = vmatpush1.bf16.msra.mxu0 %v877
    %902 = vmatprep.subr.bf16.mxu0 0
    %903 = vmatpush1.bf16.msra.mxu0 0
    %904 = vmatprep.subr.bf16.mxu0 0
    %905 = vmatpush1.bf16.msra.mxu0 0
    %906 = vmatprep.subr.bf16.mxu0 0
    %907 = vmatpush1.bf16.msra.mxu0 0
    %908 = vmatprep.subr.bf16.mxu0 0
    %909 = vmatpush1.bf16.msra.mxu0 0
    %910 = vmatprep.subr.bf16.mxu0 0
    %911 = vmatpush1.bf16.msra.mxu0 0
    %912 = vmatprep.subr.bf16.mxu0 0
    %913 = vmatpush1.bf16.msra.mxu0 0
    %914 = vmatprep.subr.bf16.mxu0 0
    %915 = vmatpush1.bf16.msra.mxu0 0
    %916 = vmatprep.subr.bf16.mxu0 0
    %917 = vmatpush1.bf16.msra.mxu0 0
    %918 = vmatprep.mubr.bf16.mxu0 0
    %919 = vmatmul.mubr.bf16.gmra.mrb[0].mxu0 %v817
    %v920 = vpop.f32.mrb[0].mxu0
    %v921 = vadd.f32 %v837, %v920
    %v922 = vpop.f32.mrb[0].mxu0
    %v923 = vpop.f32.mrb[0].mxu0
    %v924 = vadd.f32 %v837, %v923
    %v925 = vpop.f32.mrb[0].mxu0
    %926 = vdwg.mxu0
    %v927 = vadd.f32 %v921, %v732
    %v928 = vadd.f32 %v924, %v733
    %v929 = vsel %vm64, %v927, 0.0
    %930 = vadd.xlane.f32.xlu0 %v929
    %v931 = vpop.xlane.xlu0 %930
    %v932 = vsel %vm64, %v928, 0.0
    %933 = vadd.xlane.f32.xlu0 %v932
    %v934 = vpop.xlane.xlu0 %933
    %v935 = vmul.f32 %v931, %v701
    %v936 = vmul.f32 %v934, %v701
    %v937 = vsub.f32 %v927, %v935
    %v938 = vsub.f32 %v928, %v936
    %v939 = vmul.f32 %v937, %v937
    %v940 = vmul.f32 %v938, %v938
    %v941 = vsel %vm64, %v939, 0.0
    %942 = vadd.xlane.f32.xlu0 %v941
    %v943 = vpop.xlane.xlu0 %942
    %v944 = vsel %vm64, %v940, 0.0
    %945 = vadd.xlane.f32.xlu0 %v944
    %v946 = vpop.xlane.xlu0 %945
    %v947 = vmul.f32 %v943, %v701
    %v948 = vmul.f32 %v946, %v701
    %v949 = vadd.f32 %v947, 1e-12
    %v950 = vadd.f32 %v948, 1e-12
    %v951 = vrsqrt.pop %v949
    %v952 = vrsqrt.pop %v950
    %v953 = vmul.f32 %v937, %v951
    %v954 = vmul.f32 %v938, %v952
    %v955 = vlaneseq
    %v956 = vshrl.u32 %v955, 7
    %v957 = vsub.s32 6, %v956
    %v958 = vrot.slane %v43, %v957
    %v959 = vmul.f32 %v953, %v958
    %v960 = vmul.f32 %v954, %v958
    %v961 = vlaneseq
    %v962 = vshrl.u32 %v961, 7
    %v963 = vsub.s32 7, %v962
    %v964 = vrot.slane %v43, %v963
    %v965 = vadd.f32 %v959, %v964
    %v966 = vadd.f32 %v960, %v964
    %967 = vst.msk [vmem:[#allocation5] sm:$0xff] %vm64, %v965
    %968 = vst.msk [vmem:[#allocation5 + $0x8] sm:$0xff] %vm64, %v966
    // Predicated region
    $region34: #{tpu_custom_call.1} parent=1 // pred_check
      _
    $region35: #{tpu_custom_call.1} parent=1 // pred_check_branch
      %970 = sbr.rel (0) target = $region37
    $region36: #{tpu_custom_call.1} parent=1 // pred_region
      %s972 = ssub.s32 256, 256
      %973 = vsyncadd [#allocation4], %s972
      %s974 = sshll.u32 [#allocation5], 4
      %s975 = int_to_ptr.vmem [resolvable:$true] %s974
      %980 = dma.vmem_to_hbm [thread:$0]  %s975, 256, %s7, [#allocation4], 128, 128, 8
    $region37: #{tpu_custom_call.1} parent=1 // pred_fallthru
      _
    // Predicated region
    $region38: #{tpu_custom_call.1} parent=1 // pred_check
      _
    $region39: #{tpu_custom_call.1} parent=1 // pred_check_branch
      %982 = sbr.rel (0) target = $region41
    $region40: #{tpu_custom_call.1} parent=1 // pred_region
      %983 = dma.done [#allocation4], 256
    $region41: #{tpu_custom_call.1} parent=1 // pred_fallthru
      _
    %984 = vsyncpa [#allocation3], 1
    %985 = vsyncpa [#allocation4], 1

</llo_original>
